<compile_context>
chip_gen: v7x
topology: tpu7x:2x2x1
jax: 0.10.0
libtpu: 0.0.40
codegen_flags: <defaults>
</compile_context>

<pallas_src>
import jax
import jax.numpy as jnp
from jax.experimental import pallas as pl
from jax.experimental.pallas import tpu as pltpu


def _dwconv3x3_kernel(xp_ref, w_ref, o_ref):
    """Depthwise 3x3 conv for one (batch, H-block) grid step.

    xp_ref : (HP, WP, CP) full zero-padded input plane for this batch element
                          (1-px spatial halo, channels padded to 128).
    w_ref  : (16, CP)     row k (k < 9) holds tap (dy, dx) = (k//3, k%3); rest 0.
    o_ref  : (OH, WP, CP) output rows [OH*h, OH*h + OH); columns >= W and
                          channels >= C hold garbage sliced away by the wrapper.
    """
    h = pl.program_id(1)                       # H-block index
    OH = o_ref.shape[0]
    WP = xp_ref.shape[1]
    CP = xp_ref.shape[2]
    row0 = h * OH                              # first padded input row of block

    # Hoist the 9 per-channel weight vectors; broadcast over sublanes once.
    w_all = w_ref[...]                                               # (16, CP)
    taps = [jnp.broadcast_to(w_all[k:k + 1, :], (WP, CP)) for k in range(9)]

    # Input-row-stationary, fully unrolled: padded input row (row0 + j) feeds
    # local output rows y = j - dy for dy in {0,1,2} (clipped to [0, OH)).
    # Each input row: 1 load + 2 XLU rolls; per (y, dy) pair: 3 VALU muls +
    # 3 VALU adds (first contribution initializes the accumulator).
    acc = [None] * OH
    for j in range(OH + 2):
        row = xp_ref[row0 + j].astype(jnp.float32)                   # (WP, CP)
        # shifted_dx[w] = row[w + dx]; np.roll semantics -> shift = WP - dx.
        # The circular wrap only lands in columns >= W, which are never read
        # back.  Sublane rotate -> XLU slot, otherwise idle in this kernel.
        r1 = pltpu.roll(row, shift=WP - 1, axis=0)
        r2 = pltpu.roll(row, shift=WP - 2, axis=0)
        for dy in range(3):
            y = j - dy                         # local output row fed by this row
            if 0 <= y < OH:
                contrib = (row * taps[3 * dy + 0]
                           + r1 * taps[3 * dy + 1]
                           + r2 * taps[3 * dy + 2])
                acc[y] = contrib if acc[y] is None else acc[y] + contrib

    for y in range(OH):
        o_ref[y] = acc[y].astype(o_ref.dtype)


@jax.jit
def depthwise_conv3x3(x_nchw, w_oihw):
    """Depthwise 3x3 conv, stride 1, padding 1, no bias.

    x_nchw : (N, C, H, W)   float32
    w_oihw : (C, 1, 3, 3)   float32  (PyTorch depthwise weight layout)
    returns: (N, C, H, W)   float32
    """
    N, C, H, W = x_nchw.shape
    assert w_oihw.shape == (C, 1, 3, 3)

    CP = 128                                   # lane-dense channel padding
    assert C <= CP
    HP = H + 2                                 # 1-px halo rows
    WP = ((W + 2 + 7) // 8) * 8                # 1-px halo cols, sublane multiple
    HB = 2 if H % 2 == 0 else 1                # split H so both v7x TCs get work
    OH = H // HB                               # output rows per H-block

    # ONE fused relayout op: NCHW -> NHWC + spatial halo pad + channel pad.
    x_nhwc = jnp.transpose(x_nchw, (0, 2, 3, 1))
    xp = jnp.pad(x_nhwc, ((0, 0), (1, 1), (1, WP - W - 1), (0, CP - C)))

    # Weights: (C,1,3,3) -> (9, C) taps (row k = tap (k//3, k%3)) -> (16, CP).
    w9 = jnp.transpose(jnp.reshape(w_oihw[:, 0, :, :], (C, 9)), (1, 0))
    wp = jnp.pad(w9, ((0, 16 - 9), (0, CP - C)))

    out = pl.pallas_call(
        _dwconv3x3_kernel,
        out_shape=jax.ShapeDtypeStruct((N, H, WP, CP), x_nchw.dtype),
        grid_spec=pltpu.PrefetchScalarGridSpec(
            num_scalar_prefetch=0,
            grid=(N, HB),                       # batch x H-block
            in_specs=[
                # batch dim squeezed; same full padded plane for every H-block
                pl.BlockSpec((None, HP, WP, CP), lambda n, h: (n, 0, 0, 0)),
                pl.BlockSpec((16, CP), lambda n, h: (0, 0)),
            ],
            out_specs=pl.BlockSpec((None, OH, WP, CP), lambda n, h: (n, h, 0, 0)),
        ),
        compiler_params=pltpu.CompilerParams(
            dimension_semantics=("parallel", "parallel")),
    )(xp, wp)

    # ONE fused op: drop padded columns/channels, NHWC -> NCHW.
    return jnp.transpose(out[:, :, :W, :C], (0, 3, 1, 2))


if __name__ == "__main__":
    key = jax.random.PRNGKey(0)
    kx, kw = jax.random.split(key)

    # Shapes implied by the module: x212 is (1, 116, 14, 14),
    # weight is (116, 1, 3, 3) (depthwise, groups=116, no bias).
    N, C, H, W = 1, 116, 14, 14
    x = jax.random.normal(kx, (N, C, H, W), dtype=jnp.float32)
    w = jax.random.normal(kw, (C, 1, 3, 3), dtype=jnp.float32) * 0.1

    out = depthwise_conv3x3(x, w)
    out = jax.block_until_ready(out)

    # Cross-check against XLA's grouped convolution (pure-JAX reference).
    ref = jax.lax.conv_general_dilated(
        x, w,
        window_strides=(1, 1),
        padding=((1, 1), (1, 1)),
        dimension_numbers=("NCHW", "OIHW", "NCHW"),
        feature_group_count=C,
    )
    assert out.shape == (N, C, H, W)
    assert jnp.allclose(out, ref, atol=1e-4, rtol=1e-4)

    print("KERNEL_OK")
</pallas_src>

<mosaic_0001>
module attributes {stable_mosaic.version = 11 : i64} {
  func.func @_dwconv3x3_kernel(%arg0: i32, %arg1: i32, %arg2: memref<1x16x16x128xf32, #tpu.memory_space<vmem>>, %arg3: memref<16x128xf32, #tpu.memory_space<vmem>>, %arg4: memref<1x7x16x128xf32, #tpu.memory_space<vmem>>) attributes {dimension_semantics = [#tpu.dimension_semantics<parallel>, #tpu.dimension_semantics<parallel>], iteration_bounds = array<i64: 1, 2>, scalar_prefetch = 0 : i64, scratch_operands = 0 : i64, tpu.core_type = #tpu.core_type<tc>, window_params = [{transform_indices = @transform_0, window_bounds = array<i64: 1, 16, 16, 128>}, {pipeline_mode = #tpu.pipeline_mode<synchronous>, transform_indices = @transform_1, window_bounds = array<i64: 16, 128>}, {transform_indices = @transform_2, window_bounds = array<i64: 1, 7, 16, 128>}]} {
    %c7_i32 = arith.constant 7 : i32
    %0 = arith.muli %arg1, %c7_i32 : i32
    %c0 = arith.constant 0 : index
    %c0_0 = arith.constant 0 : index
    %1 = vector.load %arg3[%c0, %c0_0] : memref<16x128xf32, #tpu.memory_space<vmem>>, vector<16x128xf32>
    %2 = vector.extract_strided_slice %1 {offsets = [0, 0], sizes = [1, 128], strides = [1, 1]} : vector<16x128xf32> to vector<1x128xf32>
    %3 = vector.shape_cast %2 : vector<1x128xf32> to vector<1x128xf32>
    %4 = vector.broadcast %3 : vector<1x128xf32> to vector<16x128xf32>
    %5 = vector.extract_strided_slice %1 {offsets = [1, 0], sizes = [1, 128], strides = [1, 1]} : vector<16x128xf32> to vector<1x128xf32>
    %6 = vector.shape_cast %5 : vector<1x128xf32> to vector<1x128xf32>
    %7 = vector.broadcast %6 : vector<1x128xf32> to vector<16x128xf32>
    %8 = vector.extract_strided_slice %1 {offsets = [2, 0], sizes = [1, 128], strides = [1, 1]} : vector<16x128xf32> to vector<1x128xf32>
    %9 = vector.shape_cast %8 : vector<1x128xf32> to vector<1x128xf32>
    %10 = vector.broadcast %9 : vector<1x128xf32> to vector<16x128xf32>
    %11 = vector.extract_strided_slice %1 {offsets = [3, 0], sizes = [1, 128], strides = [1, 1]} : vector<16x128xf32> to vector<1x128xf32>
    %12 = vector.shape_cast %11 : vector<1x128xf32> to vector<1x128xf32>
    %13 = vector.broadcast %12 : vector<1x128xf32> to vector<16x128xf32>
    %14 = vector.extract_strided_slice %1 {offsets = [4, 0], sizes = [1, 128], strides = [1, 1]} : vector<16x128xf32> to vector<1x128xf32>
    %15 = vector.shape_cast %14 : vector<1x128xf32> to vector<1x128xf32>
    %16 = vector.broadcast %15 : vector<1x128xf32> to vector<16x128xf32>
    %17 = vector.extract_strided_slice %1 {offsets = [5, 0], sizes = [1, 128], strides = [1, 1]} : vector<16x128xf32> to vector<1x128xf32>
    %18 = vector.shape_cast %17 : vector<1x128xf32> to vector<1x128xf32>
    %19 = vector.broadcast %18 : vector<1x128xf32> to vector<16x128xf32>
    %20 = vector.extract_strided_slice %1 {offsets = [6, 0], sizes = [1, 128], strides = [1, 1]} : vector<16x128xf32> to vector<1x128xf32>
    %21 = vector.shape_cast %20 : vector<1x128xf32> to vector<1x128xf32>
    %22 = vector.broadcast %21 : vector<1x128xf32> to vector<16x128xf32>
    %23 = vector.extract_strided_slice %1 {offsets = [7, 0], sizes = [1, 128], strides = [1, 1]} : vector<16x128xf32> to vector<1x128xf32>
    %24 = vector.shape_cast %23 : vector<1x128xf32> to vector<1x128xf32>
    %25 = vector.broadcast %24 : vector<1x128xf32> to vector<16x128xf32>
    %26 = vector.extract_strided_slice %1 {offsets = [8, 0], sizes = [1, 128], strides = [1, 1]} : vector<16x128xf32> to vector<1x128xf32>
    %27 = vector.shape_cast %26 : vector<1x128xf32> to vector<1x128xf32>
    %28 = vector.broadcast %27 : vector<1x128xf32> to vector<16x128xf32>
    %c0_i32 = arith.constant 0 : i32
    %29 = arith.addi %0, %c0_i32 : i32
    %c0_1 = arith.constant 0 : index
    %30 = arith.index_cast %29 : i32 to index
    %c0_2 = arith.constant 0 : index
    %c0_3 = arith.constant 0 : index
    %31 = vector.load %arg2[%c0_1, %30, %c0_2, %c0_3] : memref<1x16x16x128xf32, #tpu.memory_space<vmem>>, vector<1x1x16x128xf32>
    %32 = vector.shape_cast %31 : vector<1x1x16x128xf32> to vector<16x128xf32>
    %c15_i32 = arith.constant 15 : i32
    %33 = tpu.dynamic_rotate %32 by %c15_i32 dim 0 : vector<16x128xf32>, i32 -> vector<16x128xf32>
    %c14_i32 = arith.constant 14 : i32
    %34 = tpu.dynamic_rotate %32 by %c14_i32 dim 0 : vector<16x128xf32>, i32 -> vector<16x128xf32>
    %35 = arith.mulf %32, %4 : vector<16x128xf32>
    %36 = arith.mulf %33, %7 : vector<16x128xf32>
    %37 = arith.addf %35, %36 : vector<16x128xf32>
    %38 = arith.mulf %34, %10 : vector<16x128xf32>
    %39 = arith.addf %37, %38 : vector<16x128xf32>
    %c1_i32 = arith.constant 1 : i32
    %40 = arith.addi %0, %c1_i32 : i32
    %c0_4 = arith.constant 0 : index
    %41 = arith.index_cast %40 : i32 to index
    %c0_5 = arith.constant 0 : index
    %c0_6 = arith.constant 0 : index
    %42 = vector.load %arg2[%c0_4, %41, %c0_5, %c0_6] : memref<1x16x16x128xf32, #tpu.memory_space<vmem>>, vector<1x1x16x128xf32>
    %43 = vector.shape_cast %42 : vector<1x1x16x128xf32> to vector<16x128xf32>
    %c15_i32_7 = arith.constant 15 : i32
    %44 = tpu.dynamic_rotate %43 by %c15_i32_7 dim 0 : vector<16x128xf32>, i32 -> vector<16x128xf32>
    %c14_i32_8 = arith.constant 14 : i32
    %45 = tpu.dynamic_rotate %43 by %c14_i32_8 dim 0 : vector<16x128xf32>, i32 -> vector<16x128xf32>
    %46 = arith.mulf %43, %4 : vector<16x128xf32>
    %47 = arith.mulf %44, %7 : vector<16x128xf32>
    %48 = arith.addf %46, %47 : vector<16x128xf32>
    %49 = arith.mulf %45, %10 : vector<16x128xf32>
    %50 = arith.addf %48, %49 : vector<16x128xf32>
    %51 = arith.mulf %43, %13 : vector<16x128xf32>
    %52 = arith.mulf %44, %16 : vector<16x128xf32>
    %53 = arith.addf %51, %52 : vector<16x128xf32>
    %54 = arith.mulf %45, %19 : vector<16x128xf32>
    %55 = arith.addf %53, %54 : vector<16x128xf32>
    %56 = arith.addf %39, %55 : vector<16x128xf32>
    %c2_i32 = arith.constant 2 : i32
    %57 = arith.addi %0, %c2_i32 : i32
    %c0_9 = arith.constant 0 : index
    %58 = arith.index_cast %57 : i32 to index
    %c0_10 = arith.constant 0 : index
    %c0_11 = arith.constant 0 : index
    %59 = vector.load %arg2[%c0_9, %58, %c0_10, %c0_11] : memref<1x16x16x128xf32, #tpu.memory_space<vmem>>, vector<1x1x16x128xf32>
    %60 = vector.shape_cast %59 : vector<1x1x16x128xf32> to vector<16x128xf32>
    %c15_i32_12 = arith.constant 15 : i32
    %61 = tpu.dynamic_rotate %60 by %c15_i32_12 dim 0 : vector<16x128xf32>, i32 -> vector<16x128xf32>
    %c14_i32_13 = arith.constant 14 : i32
    %62 = tpu.dynamic_rotate %60 by %c14_i32_13 dim 0 : vector<16x128xf32>, i32 -> vector<16x128xf32>
    %63 = arith.mulf %60, %4 : vector<16x128xf32>
    %64 = arith.mulf %61, %7 : vector<16x128xf32>
    %65 = arith.addf %63, %64 : vector<16x128xf32>
    %66 = arith.mulf %62, %10 : vector<16x128xf32>
    %67 = arith.addf %65, %66 : vector<16x128xf32>
    %68 = arith.mulf %60, %13 : vector<16x128xf32>
    %69 = arith.mulf %61, %16 : vector<16x128xf32>
    %70 = arith.addf %68, %69 : vector<16x128xf32>
    %71 = arith.mulf %62, %19 : vector<16x128xf32>
    %72 = arith.addf %70, %71 : vector<16x128xf32>
    %73 = arith.addf %50, %72 : vector<16x128xf32>
    %74 = arith.mulf %60, %22 : vector<16x128xf32>
    %75 = arith.mulf %61, %25 : vector<16x128xf32>
    %76 = arith.addf %74, %75 : vector<16x128xf32>
    %77 = arith.mulf %62, %28 : vector<16x128xf32>
    %78 = arith.addf %76, %77 : vector<16x128xf32>
    %79 = arith.addf %56, %78 : vector<16x128xf32>
    %c3_i32 = arith.constant 3 : i32
    %80 = arith.addi %0, %c3_i32 : i32
    %c0_14 = arith.constant 0 : index
    %81 = arith.index_cast %80 : i32 to index
    %c0_15 = arith.constant 0 : index
    %c0_16 = arith.constant 0 : index
    %82 = vector.load %arg2[%c0_14, %81, %c0_15, %c0_16] : memref<1x16x16x128xf32, #tpu.memory_space<vmem>>, vector<1x1x16x128xf32>
    %83 = vector.shape_cast %82 : vector<1x1x16x128xf32> to vector<16x128xf32>
    %c15_i32_17 = arith.constant 15 : i32
    %84 = tpu.dynamic_rotate %83 by %c15_i32_17 dim 0 : vector<16x128xf32>, i32 -> vector<16x128xf32>
    %c14_i32_18 = arith.constant 14 : i32
    %85 = tpu.dynamic_rotate %83 by %c14_i32_18 dim 0 : vector<16x128xf32>, i32 -> vector<16x128xf32>
    %86 = arith.mulf %83, %4 : vector<16x128xf32>
    %87 = arith.mulf %84, %7 : vector<16x128xf32>
    %88 = arith.addf %86, %87 : vector<16x128xf32>
    %89 = arith.mulf %85, %10 : vector<16x128xf32>
    %90 = arith.addf %88, %89 : vector<16x128xf32>
    %91 = arith.mulf %83, %13 : vector<16x128xf32>
    %92 = arith.mulf %84, %16 : vector<16x128xf32>
    %93 = arith.addf %91, %92 : vector<16x128xf32>
    %94 = arith.mulf %85, %19 : vector<16x128xf32>
    %95 = arith.addf %93, %94 : vector<16x128xf32>
    %96 = arith.addf %67, %95 : vector<16x128xf32>
    %97 = arith.mulf %83, %22 : vector<16x128xf32>
    %98 = arith.mulf %84, %25 : vector<16x128xf32>
    %99 = arith.addf %97, %98 : vector<16x128xf32>
    %100 = arith.mulf %85, %28 : vector<16x128xf32>
    %101 = arith.addf %99, %100 : vector<16x128xf32>
    %102 = arith.addf %73, %101 : vector<16x128xf32>
    %c4_i32 = arith.constant 4 : i32
    %103 = arith.addi %0, %c4_i32 : i32
    %c0_19 = arith.constant 0 : index
    %104 = arith.index_cast %103 : i32 to index
    %c0_20 = arith.constant 0 : index
    %c0_21 = arith.constant 0 : index
    %105 = vector.load %arg2[%c0_19, %104, %c0_20, %c0_21] : memref<1x16x16x128xf32, #tpu.memory_space<vmem>>, vector<1x1x16x128xf32>
    %106 = vector.shape_cast %105 : vector<1x1x16x128xf32> to vector<16x128xf32>
    %c15_i32_22 = arith.constant 15 : i32
    %107 = tpu.dynamic_rotate %106 by %c15_i32_22 dim 0 : vector<16x128xf32>, i32 -> vector<16x128xf32>
    %c14_i32_23 = arith.constant 14 : i32
    %108 = tpu.dynamic_rotate %106 by %c14_i32_23 dim 0 : vector<16x128xf32>, i32 -> vector<16x128xf32>
    %109 = arith.mulf %106, %4 : vector<16x128xf32>
    %110 = arith.mulf %107, %7 : vector<16x128xf32>
    %111 = arith.addf %109, %110 : vector<16x128xf32>
    %112 = arith.mulf %108, %10 : vector<16x128xf32>
    %113 = arith.addf %111, %112 : vector<16x128xf32>
    %114 = arith.mulf %106, %13 : vector<16x128xf32>
    %115 = arith.mulf %107, %16 : vector<16x128xf32>
    %116 = arith.addf %114, %115 : vector<16x128xf32>
    %117 = arith.mulf %108, %19 : vector<16x128xf32>
    %118 = arith.addf %116, %117 : vector<16x128xf32>
    %119 = arith.addf %90, %118 : vector<16x128xf32>
    %120 = arith.mulf %106, %22 : vector<16x128xf32>
    %121 = arith.mulf %107, %25 : vector<16x128xf32>
    %122 = arith.addf %120, %121 : vector<16x128xf32>
    %123 = arith.mulf %108, %28 : vector<16x128xf32>
    %124 = arith.addf %122, %123 : vector<16x128xf32>
    %125 = arith.addf %96, %124 : vector<16x128xf32>
    %c5_i32 = arith.constant 5 : i32
    %126 = arith.addi %0, %c5_i32 : i32
    %c0_24 = arith.constant 0 : index
    %127 = arith.index_cast %126 : i32 to index
    %c0_25 = arith.constant 0 : index
    %c0_26 = arith.constant 0 : index
    %128 = vector.load %arg2[%c0_24, %127, %c0_25, %c0_26] : memref<1x16x16x128xf32, #tpu.memory_space<vmem>>, vector<1x1x16x128xf32>
    %129 = vector.shape_cast %128 : vector<1x1x16x128xf32> to vector<16x128xf32>
    %c15_i32_27 = arith.constant 15 : i32
    %130 = tpu.dynamic_rotate %129 by %c15_i32_27 dim 0 : vector<16x128xf32>, i32 -> vector<16x128xf32>
    %c14_i32_28 = arith.constant 14 : i32
    %131 = tpu.dynamic_rotate %129 by %c14_i32_28 dim 0 : vector<16x128xf32>, i32 -> vector<16x128xf32>
    %132 = arith.mulf %129, %4 : vector<16x128xf32>
    %133 = arith.mulf %130, %7 : vector<16x128xf32>
    %134 = arith.addf %132, %133 : vector<16x128xf32>
    %135 = arith.mulf %131, %10 : vector<16x128xf32>
    %136 = arith.addf %134, %135 : vector<16x128xf32>
    %137 = arith.mulf %129, %13 : vector<16x128xf32>
    %138 = arith.mulf %130, %16 : vector<16x128xf32>
    %139 = arith.addf %137, %138 : vector<16x128xf32>
    %140 = arith.mulf %131, %19 : vector<16x128xf32>
    %141 = arith.addf %139, %140 : vector<16x128xf32>
    %142 = arith.addf %113, %141 : vector<16x128xf32>
    %143 = arith.mulf %129, %22 : vector<16x128xf32>
    %144 = arith.mulf %130, %25 : vector<16x128xf32>
    %145 = arith.addf %143, %144 : vector<16x128xf32>
    %146 = arith.mulf %131, %28 : vector<16x128xf32>
    %147 = arith.addf %145, %146 : vector<16x128xf32>
    %148 = arith.addf %119, %147 : vector<16x128xf32>
    %c6_i32 = arith.constant 6 : i32
    %149 = arith.addi %0, %c6_i32 : i32
    %c0_29 = arith.constant 0 : index
    %150 = arith.index_cast %149 : i32 to index
    %c0_30 = arith.constant 0 : index
    %c0_31 = arith.constant 0 : index
    %151 = vector.load %arg2[%c0_29, %150, %c0_30, %c0_31] : memref<1x16x16x128xf32, #tpu.memory_space<vmem>>, vector<1x1x16x128xf32>
    %152 = vector.shape_cast %151 : vector<1x1x16x128xf32> to vector<16x128xf32>
    %c15_i32_32 = arith.constant 15 : i32
    %153 = tpu.dynamic_rotate %152 by %c15_i32_32 dim 0 : vector<16x128xf32>, i32 -> vector<16x128xf32>
    %c14_i32_33 = arith.constant 14 : i32
    %154 = tpu.dynamic_rotate %152 by %c14_i32_33 dim 0 : vector<16x128xf32>, i32 -> vector<16x128xf32>
    %155 = arith.mulf %152, %4 : vector<16x128xf32>
    %156 = arith.mulf %153, %7 : vector<16x128xf32>
    %157 = arith.addf %155, %156 : vector<16x128xf32>
    %158 = arith.mulf %154, %10 : vector<16x128xf32>
    %159 = arith.addf %157, %158 : vector<16x128xf32>
    %160 = arith.mulf %152, %13 : vector<16x128xf32>
    %161 = arith.mulf %153, %16 : vector<16x128xf32>
    %162 = arith.addf %160, %161 : vector<16x128xf32>
    %163 = arith.mulf %154, %19 : vector<16x128xf32>
    %164 = arith.addf %162, %163 : vector<16x128xf32>
    %165 = arith.addf %136, %164 : vector<16x128xf32>
    %166 = arith.mulf %152, %22 : vector<16x128xf32>
    %167 = arith.mulf %153, %25 : vector<16x128xf32>
    %168 = arith.addf %166, %167 : vector<16x128xf32>
    %169 = arith.mulf %154, %28 : vector<16x128xf32>
    %170 = arith.addf %168, %169 : vector<16x128xf32>
    %171 = arith.addf %142, %170 : vector<16x128xf32>
    %c7_i32_34 = arith.constant 7 : i32
    %172 = arith.addi %0, %c7_i32_34 : i32
    %c0_35 = arith.constant 0 : index
    %173 = arith.index_cast %172 : i32 to index
    %c0_36 = arith.constant 0 : index
    %c0_37 = arith.constant 0 : index
    %174 = vector.load %arg2[%c0_35, %173, %c0_36, %c0_37] : memref<1x16x16x128xf32, #tpu.memory_space<vmem>>, vector<1x1x16x128xf32>
    %175 = vector.shape_cast %174 : vector<1x1x16x128xf32> to vector<16x128xf32>
    %c15_i32_38 = arith.constant 15 : i32
    %176 = tpu.dynamic_rotate %175 by %c15_i32_38 dim 0 : vector<16x128xf32>, i32 -> vector<16x128xf32>
    %c14_i32_39 = arith.constant 14 : i32
    %177 = tpu.dynamic_rotate %175 by %c14_i32_39 dim 0 : vector<16x128xf32>, i32 -> vector<16x128xf32>
    %178 = arith.mulf %175, %13 : vector<16x128xf32>
    %179 = arith.mulf %176, %16 : vector<16x128xf32>
    %180 = arith.addf %178, %179 : vector<16x128xf32>
    %181 = arith.mulf %177, %19 : vector<16x128xf32>
    %182 = arith.addf %180, %181 : vector<16x128xf32>
    %183 = arith.addf %159, %182 : vector<16x128xf32>
    %184 = arith.mulf %175, %22 : vector<16x128xf32>
    %185 = arith.mulf %176, %25 : vector<16x128xf32>
    %186 = arith.addf %184, %185 : vector<16x128xf32>
    %187 = arith.mulf %177, %28 : vector<16x128xf32>
    %188 = arith.addf %186, %187 : vector<16x128xf32>
    %189 = arith.addf %165, %188 : vector<16x128xf32>
    %c8_i32 = arith.constant 8 : i32
    %190 = arith.addi %0, %c8_i32 : i32
    %c0_40 = arith.constant 0 : index
    %191 = arith.index_cast %190 : i32 to index
    %c0_41 = arith.constant 0 : index
    %c0_42 = arith.constant 0 : index
    %192 = vector.load %arg2[%c0_40, %191, %c0_41, %c0_42] : memref<1x16x16x128xf32, #tpu.memory_space<vmem>>, vector<1x1x16x128xf32>
    %193 = vector.shape_cast %192 : vector<1x1x16x128xf32> to vector<16x128xf32>
    %c15_i32_43 = arith.constant 15 : i32
    %194 = tpu.dynamic_rotate %193 by %c15_i32_43 dim 0 : vector<16x128xf32>, i32 -> vector<16x128xf32>
    %c14_i32_44 = arith.constant 14 : i32
    %195 = tpu.dynamic_rotate %193 by %c14_i32_44 dim 0 : vector<16x128xf32>, i32 -> vector<16x128xf32>
    %196 = arith.mulf %193, %22 : vector<16x128xf32>
    %197 = arith.mulf %194, %25 : vector<16x128xf32>
    %198 = arith.addf %196, %197 : vector<16x128xf32>
    %199 = arith.mulf %195, %28 : vector<16x128xf32>
    %200 = arith.addf %198, %199 : vector<16x128xf32>
    %201 = arith.addf %183, %200 : vector<16x128xf32>
    %c0_45 = arith.constant 0 : index
    %c0_46 = arith.constant 0 : index
    %c0_47 = arith.constant 0 : index
    %c0_48 = arith.constant 0 : index
    %202 = vector.load %arg4[%c0_45, %c0_46, %c0_47, %c0_48] : memref<1x7x16x128xf32, #tpu.memory_space<vmem>>, vector<1x1x16x128xf32>
    %203 = vector.shape_cast %202 : vector<1x1x16x128xf32> to vector<16x128xf32>
    %204 = vector.shape_cast %79 : vector<16x128xf32> to vector<1x1x16x128xf32>
    tpu.vector_store %arg4[%c0_45, %c0_46, %c0_47, %c0_48], %204 {strides = array<i32>} : memref<1x7x16x128xf32, #tpu.memory_space<vmem>>, vector<1x1x16x128xf32>,
    %c0_49 = arith.constant 0 : index
    %c1 = arith.constant 1 : index
    %c0_50 = arith.constant 0 : index
    %c0_51 = arith.constant 0 : index
    %205 = vector.load %arg4[%c0_49, %c1, %c0_50, %c0_51] : memref<1x7x16x128xf32, #tpu.memory_space<vmem>>, vector<1x1x16x128xf32>
    %206 = vector.shape_cast %205 : vector<1x1x16x128xf32> to vector<16x128xf32>
    %207 = vector.shape_cast %102 : vector<16x128xf32> to vector<1x1x16x128xf32>
    tpu.vector_store %arg4[%c0_49, %c1, %c0_50, %c0_51], %207 {strides = array<i32>} : memref<1x7x16x128xf32, #tpu.memory_space<vmem>>, vector<1x1x16x128xf32>,
    %c0_52 = arith.constant 0 : index
    %c2 = arith.constant 2 : index
    %c0_53 = arith.constant 0 : index
    %c0_54 = arith.constant 0 : index
    %208 = vector.load %arg4[%c0_52, %c2, %c0_53, %c0_54] : memref<1x7x16x128xf32, #tpu.memory_space<vmem>>, vector<1x1x16x128xf32>
    %209 = vector.shape_cast %208 : vector<1x1x16x128xf32> to vector<16x128xf32>
    %210 = vector.shape_cast %125 : vector<16x128xf32> to vector<1x1x16x128xf32>
    tpu.vector_store %arg4[%c0_52, %c2, %c0_53, %c0_54], %210 {strides = array<i32>} : memref<1x7x16x128xf32, #tpu.memory_space<vmem>>, vector<1x1x16x128xf32>,
    %c0_55 = arith.constant 0 : index
    %c3 = arith.constant 3 : index
    %c0_56 = arith.constant 0 : index
    %c0_57 = arith.constant 0 : index
    %211 = vector.load %arg4[%c0_55, %c3, %c0_56, %c0_57] : memref<1x7x16x128xf32, #tpu.memory_space<vmem>>, vector<1x1x16x128xf32>
    %212 = vector.shape_cast %211 : vector<1x1x16x128xf32> to vector<16x128xf32>
    %213 = vector.shape_cast %148 : vector<16x128xf32> to vector<1x1x16x128xf32>
    tpu.vector_store %arg4[%c0_55, %c3, %c0_56, %c0_57], %213 {strides = array<i32>} : memref<1x7x16x128xf32, #tpu.memory_space<vmem>>, vector<1x1x16x128xf32>,
    %c0_58 = arith.constant 0 : index
    %c4 = arith.constant 4 : index
    %c0_59 = arith.constant 0 : index
    %c0_60 = arith.constant 0 : index
    %214 = vector.load %arg4[%c0_58, %c4, %c0_59, %c0_60] : memref<1x7x16x128xf32, #tpu.memory_space<vmem>>, vector<1x1x16x128xf32>
    %215 = vector.shape_cast %214 : vector<1x1x16x128xf32> to vector<16x128xf32>
    %216 = vector.shape_cast %171 : vector<16x128xf32> to vector<1x1x16x128xf32>
    tpu.vector_store %arg4[%c0_58, %c4, %c0_59, %c0_60], %216 {strides = array<i32>} : memref<1x7x16x128xf32, #tpu.memory_space<vmem>>, vector<1x1x16x128xf32>,
    %c0_61 = arith.constant 0 : index
    %c5 = arith.constant 5 : index
    %c0_62 = arith.constant 0 : index
    %c0_63 = arith.constant 0 : index
    %217 = vector.load %arg4[%c0_61, %c5, %c0_62, %c0_63] : memref<1x7x16x128xf32, #tpu.memory_space<vmem>>, vector<1x1x16x128xf32>
    %218 = vector.shape_cast %217 : vector<1x1x16x128xf32> to vector<16x128xf32>
    %219 = vector.shape_cast %189 : vector<16x128xf32> to vector<1x1x16x128xf32>
    tpu.vector_store %arg4[%c0_61, %c5, %c0_62, %c0_63], %219 {strides = array<i32>} : memref<1x7x16x128xf32, #tpu.memory_space<vmem>>, vector<1x1x16x128xf32>,
    %c0_64 = arith.constant 0 : index
    %c6 = arith.constant 6 : index
    %c0_65 = arith.constant 0 : index
    %c0_66 = arith.constant 0 : index
    %220 = vector.load %arg4[%c0_64, %c6, %c0_65, %c0_66] : memref<1x7x16x128xf32, #tpu.memory_space<vmem>>, vector<1x1x16x128xf32>
    %221 = vector.shape_cast %220 : vector<1x1x16x128xf32> to vector<16x128xf32>
    %222 = vector.shape_cast %201 : vector<16x128xf32> to vector<1x1x16x128xf32>
    tpu.vector_store %arg4[%c0_64, %c6, %c0_65, %c0_66], %222 {strides = array<i32>} : memref<1x7x16x128xf32, #tpu.memory_space<vmem>>, vector<1x1x16x128xf32>,
    return
  }
  func.func @transform_0(%arg0: i32, %arg1: i32) -> (i32, i32, i32, i32) {
    %c0_i32 = arith.constant 0 : i32
    %c0_i32_0 = arith.constant 0 : i32
    %c0_i32_1 = arith.constant 0 : i32
    %c0_i32_2 = arith.constant 0 : i32
    return %arg0, %c0_i32, %c0_i32_0, %c0_i32_1 : i32, i32, i32, i32
  }
  func.func @transform_1(%arg0: i32, %arg1: i32) -> (i32, i32) {
    %c0_i32 = arith.constant 0 : i32
    %c0_i32_0 = arith.constant 0 : i32
    %c0_i32_1 = arith.constant 0 : i32
    return %c0_i32, %c0_i32_0 : i32, i32
  }
  func.func @transform_2(%arg0: i32, %arg1: i32) -> (i32, i32, i32, i32) {
    %c0_i32 = arith.constant 0 : i32
    %c0_i32_0 = arith.constant 0 : i32
    %c0_i32_1 = arith.constant 0 : i32
    return %arg0, %arg1, %c0_i32, %c0_i32_0 : i32, i32, i32, i32
  }
}

</mosaic_0001>

<llo_original>
// kernel: squeeze.1
$region0: #{squeeze.1}
  %s0 = inlined_call_operand.vmem [shape: f32[116,3,3], index: 0, kind: input, shape index: {}]
  %s1 = inlined_call_operand.vmem [shape: f32[116,9], index: 1, kind: output, shape index: {}]
  $region1: #{squeeze.1} parent=0
    #allocation0 [shape = 'u8[12288]{0}', space=vmem, size = 0x3000, scoped, tag = 'scoped mem for input reshape']
    %s3 = sshllo.u32 0, 4
    %s4 = smul.addr 4, 2
    %s5 = scalar_lea.vmem %s0, %s4
    %v6 = vld [vmem:[%s5] sm:%s3]
    %s7 = scalar_lea.vmem [#allocation0], 16
    %8 = vst [vmem:[%s7] sm:%s3] %v6
    %s9 = scalar_lea.vmem %s0, 4
    %v10 = vld [vmem:[%s9] sm:%s3]
    %s11 = scalar_lea.vmem [#allocation0], 8
    %12 = vst [vmem:[%s11] sm:%s3] %v10
    %v13 = vld [vmem:[%s0] sm:%s3]
    %14 = vst [vmem:[#allocation0] sm:%s3] %v13
    %v15 = vld [vmem:[#allocation0] sm:$0x7]
    %vm16 = vcmask 949248
    %17 = vst.msk [vmem:[%s1] sm:$0x7] %vm16, %v15
    %s18 = scalar_lea.vmem [#allocation0], 8
    %v19 = vld [vmem:[%s18] sm:$0x7]
    %vm20 = vcmask 949248
    %s21 = scalar_lea.vmem %s1, 3
    %22 = vst.msk [vmem:[%s21] sm:$0x7] %vm20, %v19
    %s23 = scalar_lea.vmem [#allocation0], 16
    %v24 = vld [vmem:[%s23] sm:$0x7]
    %vm25 = vcmask 949248
    %s26 = scalar_lea.vmem %s1, 6
    %27 = vst.msk [vmem:[%s26] sm:$0x7] %vm25, %v24

// kernel: depthwise_conv3x3.1
$region0: #{depthwise_conv3x3.1}
  #allocation0 [shape = 'u32[]', space=smem, size = 0x4, offset = 0x4, fixed_abs, tag = 'smem constant byte address 0x4 - core index']
  #allocation1 [shape = 'u32[144,128]{1,0:T(1,128)}', space=vmem, size = 0x12000, scoped, tag = 'internal scratch']
  %s0 = inlined_call_operand.vmem [shape: f32[1,16,16,128], index: 0, kind: input, shape index: {}]
  %s1 = inlined_call_operand.vmem [shape: f32[16,128], index: 1, kind: input, shape index: {}]
  %s2 = inlined_call_operand.vmem [shape: f32[1,14,16,128], index: 2, kind: output, shape index: {}]
  %s3 = sld [smem:[#allocation0]]
  $region41: #{depthwise_conv3x3.1} parent=0
    _
  %s5 = ssub.s32 1, %s3
  %s6 = scalar_select 0, %s5, %s3
  loop: start=0, step=1, limit=4
  $region2: #{depthwise_conv3x3.1} parent=0 // loop_pre_header
    _
  $region3: #{depthwise_conv3x3.1} parent=0 // loop_header
    %s8 = sphi 0, %s12
    %p9 = scmp.ge.s32.totalorder %s8, 4
    %s15 = sphi 0, %s27
    %s16 = sphi 0, %s23
    %s17 = sphi 0, %s15
    %s18 = sphi 0, %s16
    %s19 = sphi 0, %s17
    %s20 = sphi 0, %s18
    %s30 = sphi 0, %s32
    %s33 = sphi 0, %s30
    %s34 = sphi 0, %s33
    %s50 = sphi 0, %s34
    %s54 = sphi 0, %s54
    %s56 = sphi 0, %s54
    %s57 = sphi 0, %s56
    %s71 = sphi 0, %s57
    %s79 = sphi 0, %s81
    %s82 = sphi 0, %s79
    %s83 = sphi 0, %s82
    %s99 = sphi 0, %s83
  $region4: #{depthwise_conv3x3.1} parent=0 // loop_header_branch
    %11 = sbr.rel (%p9) target = $region8
  $region5: #{depthwise_conv3x3.1} parent=0 // loop_body
    %s13 = ssub.s32 %s8, 1
    %s14 = ssub.s32 %s8, 2
    %s21 = sadd.s32 1, %s16
    %p22 = scmp.ge.s32.totalorder %s21, 2
    %s23 = scalar_select %p22, 0, %s21
    %s24 = sadd.s32 1, %s15
    %s25 = scalar_select %p22, %s24, %s15
    %p26 = scmp.ge.s32.totalorder %s25, 1
    %s27 = scalar_select %p26, 0, %s25
    %s28 = ssub.s32 %s15, %s27
    %p29 = scmp.eq.s32.totalorder %s28, 0
    %s31 = sadd.s32 %s30, 1
    %s32 = scalar_select %p29, %s30, %s31
    %p35 = pneg %p29
    %p36 = scmp.eq.s32.totalorder %s8, 1
    %p37 = por %p35, %p36
    %p38 = scmp.ne.s32.totalorder %s30, %s33
    %p39 = scmp.eq.s32.totalorder %s8, 0
    %p40 = por %p38, %p39
    %p41 = scmp.ne.s32.totalorder %s30, %s33
    %p42 = scmp.eq.s32.totalorder %s13, 1
    %p43 = por %p41, %p42
    %p44 = scmp.ne.s32.totalorder %s33, %s34
    %p45 = scmp.eq.s32.totalorder %s13, 0
    %p46 = por %p44, %p45
    %p47 = scmp.ne.s32.totalorder %s33, %s34
    %p48 = scmp.eq.s32.totalorder %s14, 1
    %p49 = por %p47, %p48
    %p51 = scmp.ne.s32.totalorder %s34, %s50
    %p52 = scmp.eq.s32.totalorder %s14, 0
    %p53 = por %p51, %p52
    %s55 = sadd.s32 %s54, 1
    %p58 = scmp.eq.s32.totalorder %s8, 1
    %p59 = scmp.ne.s32.totalorder %s54, %s56
    %p60 = scmp.eq.s32.totalorder %s8, 0
    %p61 = por %p59, %p60
    %p62 = scmp.ne.s32.totalorder %s54, %s56
    %p63 = scmp.eq.s32.totalorder %s13, 1
    %p64 = por %p62, %p63
    %p65 = scmp.ne.s32.totalorder %s56, %s57
    %p66 = scmp.eq.s32.totalorder %s13, 0
    %p67 = por %p65, %p66
    %p68 = scmp.ne.s32.totalorder %s56, %s57
    %p69 = scmp.eq.s32.totalorder %s14, 1
    %p70 = por %p68, %p69
    %p72 = scmp.ne.s32.totalorder %s57, %s71
    %p73 = scmp.eq.s32.totalorder %s14, 0
    %p74 = por %p72, %p73
    %s75 = ssub.s32 %s15, %s27
    %s76 = ssub.s32 %s16, %s23
    %s77 = sor.u32 %s75, %s76
    %p78 = scmp.eq.s32.totalorder %s77, 0
    %s80 = sadd.s32 %s79, 1
    %s81 = scalar_select %p78, %s79, %s80
    %p84 = pneg %p78
    %p85 = scmp.eq.s32.totalorder %s8, 1
    %p86 = por %p84, %p85
    %p87 = scmp.ne.s32.totalorder %s79, %s82
    %p88 = scmp.eq.s32.totalorder %s8, 0
    %p89 = por %p87, %p88
    %p90 = scmp.ne.s32.totalorder %s79, %s82
    %p91 = scmp.eq.s32.totalorder %s13, 1
    %p92 = por %p90, %p91
    %p93 = scmp.ne.s32.totalorder %s82, %s83
    %p94 = scmp.eq.s32.totalorder %s13, 0
    %p95 = por %p93, %p94
    %p96 = scmp.ne.s32.totalorder %s82, %s83
    %p97 = scmp.eq.s32.totalorder %s14, 1
    %p98 = por %p96, %p97
    %p100 = scmp.ne.s32.totalorder %s83, %s99
    %p101 = scmp.eq.s32.totalorder %s14, 0
    %p102 = por %p100, %p101
    %p103 = scmp.le.s32.totalorder 1, %s8
    %p104 = scmp.lt.s32.totalorder %s8, 3
    %p105 = pnand %p103, %p104
    %p106 = pneg %p105
    // Predicated region
    $region9: #{depthwise_conv3x3.1} parent=5 // pred_check
      _
    $region10: #{depthwise_conv3x3.1} parent=5 // pred_check_branch
      %108 = sbr.rel (%p105) target = $region12
    $region11: #{depthwise_conv3x3.1} parent=5 // pred_region
      %s109 = ssub.s32 %s8, 1
      // Predicated region
      $region13: #{depthwise_conv3x3.1} parent=11 // pred_check
        %p110 = pneg %p46
      $region14: #{depthwise_conv3x3.1} parent=11 // pred_check_branch
        %112 = sbr.rel (%p110) target = $region16
      $region15: #{depthwise_conv3x3.1} parent=11 // pred_region
        %p113 = scmp.lt.s32.totalorder %s17, 0
        %s114 = scalar_select %p113, %s17, 0
        %s115 = smul.addr %s114, 32
        %s116 = smul.addr %s115, 8
        %s117 = scalar_lea.vmem %s0, %s116
      $region16: #{depthwise_conv3x3.1} parent=11 // pred_fallthru
        _
      // Predicated region
      $region17: #{depthwise_conv3x3.1} parent=11 // pred_check
        %p118 = pneg %p67
      $region18: #{depthwise_conv3x3.1} parent=11 // pred_check_branch
        %120 = sbr.rel (%p118) target = $region20
      $region19: #{depthwise_conv3x3.1} parent=11 // pred_region
        _
      $region20: #{depthwise_conv3x3.1} parent=11 // pred_fallthru
        _
    $region12: #{depthwise_conv3x3.1} parent=5 // pred_fallthru
      _
    %p121 = scmp.lt.s32.totalorder %s8, 2
    // Predicated region
    $region21: #{depthwise_conv3x3.1} parent=5 // pred_check
      %p122 = pneg %p121
    $region22: #{depthwise_conv3x3.1} parent=5 // pred_check_branch
      %124 = sbr.rel (%p122) target = $region24
    $region23: #{depthwise_conv3x3.1} parent=5 // pred_region
      _
    $region24: #{depthwise_conv3x3.1} parent=5 // pred_fallthru
      _
    %p125 = scmp.le.s32.totalorder 1, %s8
    %p126 = scmp.lt.s32.totalorder %s8, 3
    %p127 = pnand %p125, %p126
    %p128 = pneg %p127
    // Predicated region
    $region25: #{depthwise_conv3x3.1} parent=5 // pred_check
      _
    $region26: #{depthwise_conv3x3.1} parent=5 // pred_check_branch
      %130 = sbr.rel (%p127) target = $region28
    $region27: #{depthwise_conv3x3.1} parent=5 // pred_region
      %s131 = ssub.s32 %s8, 1
      %p132 = scmp.lt.s32.totalorder %s17, 0
      %s133 = scalar_select %p132, %s17, 0
      %s134 = smul.addr %s133, 32
      %s135 = smul.addr %s134, 8
      %s136 = scalar_lea.vmem %s0, %s135
      %p137 = pneg %p46
      %p138 = pneg %p43
      %p139 = pneg %p67
      %p140 = pneg %p64
      %p141 = pneg %p95
      %p142 = pneg %p92
      %s143 = smul.u32 7, %s18
      %p144 = scmp.lt.s32.totalorder %s17, 0
      %s145 = scalar_select %p144, %s17, 0
      %p146 = scmp.lt.s32.totalorder %s143, 13
      %s147 = scalar_select %p146, %s143, 13
      %s148 = smul.addr %s147, 2
      %s149 = smul.addr %s145, 28
      %s150 = sadd.s32 %s148, %s149
      %s151 = smul.addr %s150, 8
      %s152 = scalar_lea.vmem %s2, %s151
      %p153 = scmp.lt.s32.totalorder %s17, 0
      %s154 = scalar_select %p153, %s17, 0
      %s155 = smul.addr %s154, 32
      %s156 = smul.addr %s155, 8
      %s157 = scalar_lea.vmem %s0, %s156
      %s158 = smul.u32 7, %s18
      %p159 = scmp.lt.s32.totalorder %s17, 0
      %s160 = scalar_select %p159, %s17, 0
      %p161 = scmp.lt.s32.totalorder %s158, 13
      %s162 = scalar_select %p161, %s158, 13
      %s163 = smul.addr %s162, 2
      %s164 = smul.addr %s160, 28
      %s165 = sadd.s32 %s163, %s164
      %s166 = smul.addr %s165, 8
      %s167 = scalar_lea.vmem %s2, %s166
      %s168 = smul.u32 7, %s18
      %s169 = smul.u32 %s18, 7
      %v170 = vld [vmem:[%s1] sm:$0xff]
      %v171 = vld [vmem:[%s1 + $0x8] sm:$0xff]
      %v172 = vlaneseq
      %v173 = vshrl.u32 %v172, 7
      %v174 = vsub.s32 0, %v173
      %v175 = vrot.slane %v170, %v174
      %v176 = vlaneseq
      %v177 = vshrl.u32 %v176, 7
      %v178 = vsub.s32 1, %v177
      %v179 = vrot.slane %v170, %v178
      %v180 = vlaneseq
      %v181 = vshrl.u32 %v180, 7
      %v182 = vsub.s32 2, %v181
      %v183 = vrot.slane %v170, %v182
      %v184 = vlaneseq
      %v185 = vshrl.u32 %v184, 7
      %v186 = vsub.s32 3, %v185
      %v187 = vrot.slane %v170, %v186
      %v188 = vlaneseq
      %v189 = vshrl.u32 %v188, 7
      %v190 = vsub.s32 4, %v189
      %v191 = vrot.slane %v170, %v190
      %v192 = vlaneseq
      %v193 = vshrl.u32 %v192, 7
      %v194 = vsub.s32 5, %v193
      %v195 = vrot.slane %v170, %v194
      %v196 = vlaneseq
      %v197 = vshrl.u32 %v196, 7
      %v198 = vsub.s32 6, %v197
      %v199 = vrot.slane %v170, %v198
      %v200 = vlaneseq
      %v201 = vshrl.u32 %v200, 7
      %v202 = vsub.s32 7, %v201
      %v203 = vrot.slane %v170, %v202
      %v204 = vlaneseq
      %v205 = vshrl.u32 %v204, 7
      %v206 = vsub.s32 0, %v205
      %v207 = vrot.slane %v171, %v206
      %s208 = smul.u32 %s169, 16
      %s209 = scalar_lea.vmem %s157, %s208
      %v210 = vld [vmem:[%s209] sm:$0xff]
      %v211 = vld [vmem:[%s209 + $0x8] sm:$0xff]
      %v212 = vrot.slane %v210, 1
      %v213 = vrot.slane %v211, 1
      %v214 = vlaneseq
      %v215 = vshrl.u32 %v214, 7
      %vm216 = vcmp.lt.s32.totalorder %v215, 7
      %v217 = vsel %vm216, %v212, %v213
      %v218 = vsel %vm216, %v213, %v212
      %v219 = vrot.slane %v210, 2
      %v220 = vrot.slane %v211, 2
      %vm221 = vcmp.lt.s32.totalorder %v215, 6
      %v222 = vsel %vm221, %v219, %v220
      %v223 = vsel %vm221, %v220, %v219
      %v224 = vmul.f32 %v210, %v175
      %v225 = vmul.f32 %v211, %v175
      %v226 = vmul.f32 %v217, %v179
      %v227 = vmul.f32 %v218, %v179
      %v228 = vadd.f32 %v224, %v226
      %v229 = vadd.f32 %v225, %v227
      %v230 = vmul.f32 %v222, %v183
      %v231 = vmul.f32 %v223, %v183
      %v232 = vadd.f32 %v228, %v230
      %v233 = vadd.f32 %v229, %v231
      %s234 = sadd.s32 %s169, 1
      %s235 = smul.u32 %s234, 16
      %s236 = scalar_lea.vmem %s157, %s235
      %v237 = vld [vmem:[%s236] sm:$0xff]
      %v238 = vld [vmem:[%s236 + $0x8] sm:$0xff]
      %v239 = vrot.slane %v237, 1
      %v240 = vrot.slane %v238, 1
      %v241 = vsel %vm216, %v239, %v240
      %v242 = vsel %vm216, %v240, %v239
      %v243 = vrot.slane %v237, 2
      %v244 = vrot.slane %v238, 2
      %v245 = vsel %vm221, %v243, %v244
      %v246 = vsel %vm221, %v244, %v243
      %v247 = vmul.f32 %v237, %v175
      %v248 = vmul.f32 %v238, %v175
      %v249 = vmul.f32 %v241, %v179
      %v250 = vmul.f32 %v242, %v179
      %v251 = vadd.f32 %v247, %v249
      %v252 = vadd.f32 %v248, %v250
      %v253 = vmul.f32 %v245, %v183
      %v254 = vmul.f32 %v246, %v183
      %v255 = vadd.f32 %v251, %v253
      %v256 = vadd.f32 %v252, %v254
      %v257 = vmul.f32 %v237, %v187
      %v258 = vmul.f32 %v238, %v187
      %v259 = vmul.f32 %v241, %v191
      %v260 = vmul.f32 %v242, %v191
      %v261 = vadd.f32 %v257, %v259
      %v262 = vadd.f32 %v258, %v260
      %v263 = vmul.f32 %v245, %v195
      %v264 = vmul.f32 %v246, %v195
      %v265 = vadd.f32 %v261, %v263
      %v266 = vadd.f32 %v262, %v264
      %v267 = vadd.f32 %v232, %v265
      %v268 = vadd.f32 %v233, %v266
      %s269 = sadd.s32 %s169, 2
      %s270 = smul.u32 %s269, 16
      %s271 = scalar_lea.vmem %s157, %s270
      %v272 = vld [vmem:[%s271] sm:$0xff]
      %v273 = vld [vmem:[%s271 + $0x8] sm:$0xff]
      %v274 = vrot.slane %v272, 1
      %v275 = vrot.slane %v273, 1
      %v276 = vsel %vm216, %v274, %v275
      %v277 = vsel %vm216, %v275, %v274
      %v278 = vrot.slane %v272, 2
      %v279 = vrot.slane %v273, 2
      %v280 = vsel %vm221, %v278, %v279
      %v281 = vsel %vm221, %v279, %v278
      %v282 = vmul.f32 %v272, %v175
      %v283 = vmul.f32 %v273, %v175
      %v284 = vmul.f32 %v276, %v179
      %v285 = vmul.f32 %v277, %v179
      %v286 = vadd.f32 %v282, %v284
      %v287 = vadd.f32 %v283, %v285
      %v288 = vmul.f32 %v280, %v183
      %v289 = vmul.f32 %v281, %v183
      %v290 = vadd.f32 %v286, %v288
      %v291 = vadd.f32 %v287, %v289
      %v292 = vmul.f32 %v272, %v187
      %v293 = vmul.f32 %v273, %v187
      %v294 = vmul.f32 %v276, %v191
      %v295 = vmul.f32 %v277, %v191
      %v296 = vadd.f32 %v292, %v294
      %v297 = vadd.f32 %v293, %v295
      %v298 = vmul.f32 %v280, %v195
      %v299 = vmul.f32 %v281, %v195
      %v300 = vadd.f32 %v296, %v298
      %v301 = vadd.f32 %v297, %v299
      %v302 = vadd.f32 %v255, %v300
      %v303 = vadd.f32 %v256, %v301
      %v304 = vmul.f32 %v272, %v199
      %v305 = vmul.f32 %v273, %v199
      %v306 = vmul.f32 %v276, %v203
      %v307 = vmul.f32 %v277, %v203
      %v308 = vadd.f32 %v304, %v306
      %v309 = vadd.f32 %v305, %v307
      %v310 = vmul.f32 %v280, %v207
      %v311 = vmul.f32 %v281, %v207
      %v312 = vadd.f32 %v308, %v310
      %v313 = vadd.f32 %v309, %v311
      %v314 = vadd.f32 %v267, %v312
      %v315 = vadd.f32 %v268, %v313
      %s316 = sadd.s32 %s169, 3
      %s317 = smul.u32 %s316, 16
      %s318 = scalar_lea.vmem %s157, %s317
      %v319 = vld [vmem:[%s318] sm:$0xff]
      %v320 = vld [vmem:[%s318 + $0x8] sm:$0xff]
      %v321 = vrot.slane %v319, 1
      %v322 = vrot.slane %v320, 1
      %v323 = vsel %vm216, %v321, %v322
      %v324 = vsel %vm216, %v322, %v321
      %v325 = vrot.slane %v319, 2
      %v326 = vrot.slane %v320, 2
      %v327 = vsel %vm221, %v325, %v326
      %v328 = vsel %vm221, %v326, %v325
      %v329 = vmul.f32 %v319, %v175
      %v330 = vmul.f32 %v320, %v175
      %v331 = vmul.f32 %v323, %v179
      %v332 = vmul.f32 %v324, %v179
      %v333 = vadd.f32 %v329, %v331
      %v334 = vadd.f32 %v330, %v332
      %v335 = vmul.f32 %v327, %v183
      %v336 = vmul.f32 %v328, %v183
      %v337 = vadd.f32 %v333, %v335
      %v338 = vadd.f32 %v334, %v336
      %v339 = vmul.f32 %v319, %v187
      %v340 = vmul.f32 %v320, %v187
      %v341 = vmul.f32 %v323, %v191
      %v342 = vmul.f32 %v324, %v191
      %v343 = vadd.f32 %v339, %v341
      %v344 = vadd.f32 %v340, %v342
      %v345 = vmul.f32 %v327, %v195
      %v346 = vmul.f32 %v328, %v195
      %v347 = vadd.f32 %v343, %v345
      %v348 = vadd.f32 %v344, %v346
      %v349 = vadd.f32 %v290, %v347
      %v350 = vadd.f32 %v291, %v348
      %v351 = vmul.f32 %v319, %v199
      %v352 = vmul.f32 %v320, %v199
      %v353 = vmul.f32 %v323, %v203
      %v354 = vmul.f32 %v324, %v203
      %v355 = vadd.f32 %v351, %v353
      %v356 = vadd.f32 %v352, %v354
      %v357 = vmul.f32 %v327, %v207
      %v358 = vmul.f32 %v328, %v207
      %v359 = vadd.f32 %v355, %v357
      %v360 = vadd.f32 %v356, %v358
      %v361 = vadd.f32 %v302, %v359
      %v362 = vadd.f32 %v303, %v360
      %s363 = sadd.s32 %s169, 4
      %s364 = smul.u32 %s363, 16
      %s365 = scalar_lea.vmem %s157, %s364
      %v366 = vld [vmem:[%s365] sm:$0xff]
      %v367 = vld [vmem:[%s365 + $0x8] sm:$0xff]
      %v368 = vrot.slane %v366, 1
      %v369 = vrot.slane %v367, 1
      %v370 = vsel %vm216, %v368, %v369
      %v371 = vsel %vm216, %v369, %v368
      %v372 = vrot.slane %v366, 2
      %v373 = vrot.slane %v367, 2
      %v374 = vsel %vm221, %v372, %v373
      %v375 = vsel %vm221, %v373, %v372
      %v376 = vmul.f32 %v366, %v175
      %v377 = vmul.f32 %v367, %v175
      %v378 = vmul.f32 %v370, %v179
      %v379 = vmul.f32 %v371, %v179
      %v380 = vadd.f32 %v376, %v378
      %v381 = vadd.f32 %v377, %v379
      %v382 = vmul.f32 %v374, %v183
      %v383 = vmul.f32 %v375, %v183
      %v384 = vadd.f32 %v380, %v382
      %v385 = vadd.f32 %v381, %v383
      %v386 = vmul.f32 %v366, %v187
      %v387 = vmul.f32 %v367, %v187
      %v388 = vmul.f32 %v370, %v191
      %v389 = vmul.f32 %v371, %v191
      %v390 = vadd.f32 %v386, %v388
      %v391 = vadd.f32 %v387, %v389
      %v392 = vmul.f32 %v374, %v195
      %v393 = vmul.f32 %v375, %v195
      %v394 = vadd.f32 %v390, %v392
      %v395 = vadd.f32 %v391, %v393
      %v396 = vadd.f32 %v337, %v394
      %v397 = vadd.f32 %v338, %v395
      %v398 = vmul.f32 %v366, %v199
      %v399 = vmul.f32 %v367, %v199
      %v400 = vmul.f32 %v370, %v203
      %v401 = vmul.f32 %v371, %v203
      %v402 = vadd.f32 %v398, %v400
      %v403 = vadd.f32 %v399, %v401
      %v404 = vmul.f32 %v374, %v207
      %v405 = vmul.f32 %v375, %v207
      %v406 = vadd.f32 %v402, %v404
      %v407 = vadd.f32 %v403, %v405
      %v408 = vadd.f32 %v349, %v406
      %v409 = vadd.f32 %v350, %v407
      %s410 = sadd.s32 %s169, 5
      %s411 = smul.u32 %s410, 16
      %s412 = scalar_lea.vmem %s157, %s411
      %v413 = vld [vmem:[%s412] sm:$0xff]
      %v414 = vld [vmem:[%s412 + $0x8] sm:$0xff]
      %v415 = vrot.slane %v413, 1
      %v416 = vrot.slane %v414, 1
      %v417 = vsel %vm216, %v415, %v416
      %v418 = vsel %vm216, %v416, %v415
      %v419 = vrot.slane %v413, 2
      %v420 = vrot.slane %v414, 2
      %v421 = vsel %vm221, %v419, %v420
      %v422 = vsel %vm221, %v420, %v419
      %v423 = vmul.f32 %v413, %v175
      %v424 = vmul.f32 %v414, %v175
      %v425 = vmul.f32 %v417, %v179
      %v426 = vmul.f32 %v418, %v179
      %v427 = vadd.f32 %v423, %v425
      %v428 = vadd.f32 %v424, %v426
      %v429 = vmul.f32 %v421, %v183
      %v430 = vmul.f32 %v422, %v183
      %v431 = vadd.f32 %v427, %v429
      %v432 = vadd.f32 %v428, %v430
      %v433 = vmul.f32 %v413, %v187
      %v434 = vmul.f32 %v414, %v187
      %v435 = vmul.f32 %v417, %v191
      %v436 = vmul.f32 %v418, %v191
      %v437 = vadd.f32 %v433, %v435
      %v438 = vadd.f32 %v434, %v436
      %v439 = vmul.f32 %v421, %v195
      %v440 = vmul.f32 %v422, %v195
      %v441 = vadd.f32 %v437, %v439
      %v442 = vadd.f32 %v438, %v440
      %v443 = vadd.f32 %v384, %v441
      %v444 = vadd.f32 %v385, %v442
      %v445 = vmul.f32 %v413, %v199
      %v446 = vmul.f32 %v414, %v199
      %v447 = vmul.f32 %v417, %v203
      %v448 = vmul.f32 %v418, %v203
      %v449 = vadd.f32 %v445, %v447
      %v450 = vadd.f32 %v446, %v448
      %v451 = vmul.f32 %v421, %v207
      %v452 = vmul.f32 %v422, %v207
      %v453 = vadd.f32 %v449, %v451
      %v454 = vadd.f32 %v450, %v452
      %v455 = vadd.f32 %v396, %v453
      %v456 = vadd.f32 %v397, %v454
      %s457 = sadd.s32 %s169, 6
      %s458 = smul.u32 %s457, 16
      %s459 = scalar_lea.vmem %s157, %s458
      %v460 = vld [vmem:[%s459] sm:$0xff]
      %v461 = vld [vmem:[%s459 + $0x8] sm:$0xff]
      %v462 = vrot.slane %v460, 1
      %v463 = vrot.slane %v461, 1
      %v464 = vsel %vm216, %v462, %v463
      %v465 = vsel %vm216, %v463, %v462
      %v466 = vrot.slane %v460, 2
      %v467 = vrot.slane %v461, 2
      %v468 = vsel %vm221, %v466, %v467
      %v469 = vsel %vm221, %v467, %v466
      %v470 = vmul.f32 %v460, %v175
      %v471 = vmul.f32 %v461, %v175
      %v472 = vmul.f32 %v464, %v179
      %v473 = vmul.f32 %v465, %v179
      %v474 = vadd.f32 %v470, %v472
      %v475 = vadd.f32 %v471, %v473
      %v476 = vmul.f32 %v468, %v183
      %v477 = vmul.f32 %v469, %v183
      %v478 = vadd.f32 %v474, %v476
      %v479 = vadd.f32 %v475, %v477
      %v480 = vmul.f32 %v460, %v187
      %v481 = vmul.f32 %v461, %v187
      %v482 = vmul.f32 %v464, %v191
      %v483 = vmul.f32 %v465, %v191
      %v484 = vadd.f32 %v480, %v482
      %v485 = vadd.f32 %v481, %v483
      %v486 = vmul.f32 %v468, %v195
      %v487 = vmul.f32 %v469, %v195
      %v488 = vadd.f32 %v484, %v486
      %v489 = vadd.f32 %v485, %v487
      %v490 = vadd.f32 %v431, %v488
      %v491 = vadd.f32 %v432, %v489
      %v492 = vmul.f32 %v460, %v199
      %v493 = vmul.f32 %v461, %v199
      %v494 = vmul.f32 %v464, %v203
      %v495 = vmul.f32 %v465, %v203
      %v496 = vadd.f32 %v492, %v494
      %v497 = vadd.f32 %v493, %v495
      %v498 = vmul.f32 %v468, %v207
      %v499 = vmul.f32 %v469, %v207
      %v500 = vadd.f32 %v496, %v498
      %v501 = vadd.f32 %v497, %v499
      %v502 = vadd.f32 %v443, %v500
      %v503 = vadd.f32 %v444, %v501
      %s504 = sadd.s32 %s169, 7
      %s505 = smul.u32 %s504, 16
      %s506 = scalar_lea.vmem %s157, %s505
      %v507 = vld [vmem:[%s506] sm:$0xff]
      %v508 = vld [vmem:[%s506 + $0x8] sm:$0xff]
      %v509 = vrot.slane %v507, 1
      %v510 = vrot.slane %v508, 1
      %v511 = vsel %vm216, %v509, %v510
      %v512 = vsel %vm216, %v510, %v509
      %v513 = vrot.slane %v507, 2
      %v514 = vrot.slane %v508, 2
      %v515 = vsel %vm221, %v513, %v514
      %v516 = vsel %vm221, %v514, %v513
      %v517 = vmul.f32 %v507, %v187
      %v518 = vmul.f32 %v508, %v187
      %v519 = vmul.f32 %v511, %v191
      %v520 = vmul.f32 %v512, %v191
      %v521 = vadd.f32 %v517, %v519
      %v522 = vadd.f32 %v518, %v520
      %v523 = vmul.f32 %v515, %v195
      %v524 = vmul.f32 %v516, %v195
      %v525 = vadd.f32 %v521, %v523
      %v526 = vadd.f32 %v522, %v524
      %v527 = vadd.f32 %v478, %v525
      %v528 = vadd.f32 %v479, %v526
      %v529 = vmul.f32 %v507, %v199
      %v530 = vmul.f32 %v508, %v199
      %v531 = vmul.f32 %v511, %v203
      %v532 = vmul.f32 %v512, %v203
      %v533 = vadd.f32 %v529, %v531
      %v534 = vadd.f32 %v530, %v532
      %v535 = vmul.f32 %v515, %v207
      %v536 = vmul.f32 %v516, %v207
      %v537 = vadd.f32 %v533, %v535
      %v538 = vadd.f32 %v534, %v536
      %v539 = vadd.f32 %v490, %v537
      %v540 = vadd.f32 %v491, %v538
      %s541 = sadd.s32 %s169, 8
      %s542 = smul.u32 %s541, 16
      %s543 = scalar_lea.vmem %s157, %s542
      %v544 = vld [vmem:[%s543] sm:$0xff]
      %v545 = vld [vmem:[%s543 + $0x8] sm:$0xff]
      %v546 = vrot.slane %v544, 1
      %v547 = vrot.slane %v545, 1
      %v548 = vsel %vm216, %v546, %v547
      %v549 = vsel %vm216, %v547, %v546
      %v550 = vrot.slane %v544, 2
      %v551 = vrot.slane %v545, 2
      %v552 = vsel %vm221, %v550, %v551
      %v553 = vsel %vm221, %v551, %v550
      %v554 = vmul.f32 %v544, %v199
      %v555 = vmul.f32 %v545, %v199
      %v556 = vmul.f32 %v548, %v203
      %v557 = vmul.f32 %v549, %v203
      %v558 = vadd.f32 %v554, %v556
      %v559 = vadd.f32 %v555, %v557
      %v560 = vmul.f32 %v552, %v207
      %v561 = vmul.f32 %v553, %v207
      %v562 = vadd.f32 %v558, %v560
      %v563 = vadd.f32 %v559, %v561
      %v564 = vadd.f32 %v527, %v562
      %v565 = vadd.f32 %v528, %v563
      %566 = vst [vmem:[%s167] sm:$0xff] %v314
      %567 = vst [vmem:[%s167 + $0x8] sm:$0xff] %v315
      %s568 = scalar_lea.vmem %s167, 16
      %569 = vst [vmem:[%s568] sm:$0xff] %v361
      %570 = vst [vmem:[%s568 + $0x8] sm:$0xff] %v362
      %s571 = scalar_lea.vmem %s167, 32
      %572 = vst [vmem:[%s571] sm:$0xff] %v408
      %573 = vst [vmem:[%s571 + $0x8] sm:$0xff] %v409
      %s574 = scalar_lea.vmem %s167, 48
      %575 = vst [vmem:[%s574] sm:$0xff] %v455
      %576 = vst [vmem:[%s574 + $0x8] sm:$0xff] %v456
      %s577 = scalar_lea.vmem %s167, 64
      %578 = vst [vmem:[%s577] sm:$0xff] %v502
      %579 = vst [vmem:[%s577 + $0x8] sm:$0xff] %v503
      %s580 = scalar_lea.vmem %s167, 80
      %581 = vst [vmem:[%s580] sm:$0xff] %v539
      %582 = vst [vmem:[%s580 + $0x8] sm:$0xff] %v540
      %s583 = scalar_lea.vmem %s167, 96
      %584 = vst [vmem:[%s583] sm:$0xff] %v564
      %585 = vst [vmem:[%s583 + $0x8] sm:$0xff] %v565
      %s586 = smul.u32 7, %s18
      %p587 = scmp.lt.s32.totalorder %s17, 0
      %s588 = scalar_select %p587, %s17, 0
      %p589 = scmp.lt.s32.totalorder %s586, 13
      %s590 = scalar_select %p589, %s586, 13
      %s591 = smul.addr %s590, 2
      %s592 = smul.addr %s588, 28
      %s593 = sadd.s32 %s591, %s592
      %s594 = smul.addr %s593, 8
      %s595 = scalar_lea.vmem %s2, %s594
      // Predicated region
      $region29: #{depthwise_conv3x3.1} parent=27 // pred_check
        %p596 = pneg %p92
      $region30: #{depthwise_conv3x3.1} parent=27 // pred_check_branch
        %598 = sbr.rel (%p596) target = $region32
      $region31: #{depthwise_conv3x3.1} parent=27 // pred_region
        %s599 = smul.u32 7, %s18
      $region32: #{depthwise_conv3x3.1} parent=27 // pred_fallthru
        _
    $region28: #{depthwise_conv3x3.1} parent=5 // pred_fallthru
      _
    %p600 = scmp.le.s32.totalorder 2, %s8
    // Predicated region
    $region33: #{depthwise_conv3x3.1} parent=5 // pred_check
      %p601 = pneg %p600
    $region34: #{depthwise_conv3x3.1} parent=5 // pred_check_branch
      %603 = sbr.rel (%p601) target = $region36
    $region35: #{depthwise_conv3x3.1} parent=5 // pred_region
      %s604 = ssub.s32 %s8, 2
      // Predicated region
      $region37: #{depthwise_conv3x3.1} parent=35 // pred_check
        %p605 = pneg %p98
      $region38: #{depthwise_conv3x3.1} parent=35 // pred_check_branch
        %607 = sbr.rel (%p605) target = $region40
      $region39: #{depthwise_conv3x3.1} parent=35 // pred_region
        %s608 = smul.u32 7, %s20
        %p609 = scmp.lt.s32.totalorder %s19, 0
        %s610 = scalar_select %p609, %s19, 0
        %p611 = scmp.lt.s32.totalorder %s608, 13
        %s612 = scalar_select %p611, %s608, 13
        %s613 = smul.addr %s612, 2
        %s614 = smul.addr %s610, 28
        %s615 = sadd.s32 %s613, %s614
        %s616 = smul.addr %s615, 8
        %s617 = scalar_lea.vmem %s2, %s616
      $region40: #{depthwise_conv3x3.1} parent=35 // pred_fallthru
        _
    $region36: #{depthwise_conv3x3.1} parent=5 // pred_fallthru
      _
  $region6: #{depthwise_conv3x3.1} parent=0 // loop_footer
    %s12 = sadd.s32 1, %s8
  $region7: #{depthwise_conv3x3.1} parent=0 // loop_footer_branch
    %7 = sbr.rel target = $region3
  $region8: #{depthwise_conv3x3.1} parent=0 // loop_exit
    _

</llo_original>
